<compile_context>
chip_gen: v6e
topology: v6e:2x2x1
jax: 0.10.0
libtpu: 0.0.40
codegen_flags: <defaults>
</compile_context>

<pallas_src>
import jax
import jax.numpy as jnp
from jax.experimental import pallas as pl
from jax.experimental.pallas import tpu as pltpu

_LANES = 128


def _identity_kernel(x_ref, o_ref):
    # forward(x) = x : single whole-block VMEM copy (output HBM buffer is
    # aliased to the input buffer via input_output_aliases).
    o_ref[...] = x_ref[...]


def _identity_pallas(x2d):
    """Gridless, whole-array-block identity pallas_call on a 2-D view."""
    bytes_accessed = 2 * x2d.size * x2d.dtype.itemsize  # one read + one write
    return pl.pallas_call(
        _identity_kernel,
        out_shape=jax.ShapeDtypeStruct(x2d.shape, x2d.dtype),
        in_specs=[pl.BlockSpec(memory_space=pltpu.MemorySpace.VMEM)],
        out_specs=pl.BlockSpec(memory_space=pltpu.MemorySpace.VMEM),
        input_output_aliases={0: 0},
        cost_estimate=pl.CostEstimate(
            flops=0, transcendentals=0, bytes_accessed=bytes_accessed
        ),
    )(x2d)


def submodel_forward(x):
    """Pallas implementation of SubModel.forward (identity).

    The module's conv1 / gn / param1 are never read by forward(), exactly as
    in the reference PyTorch module, so they are not part of this signature.
    The optimal implementation is simply `return x`; the kernel below is the
    minimal-overhead Pallas form: gridless, lane-dense whole-array block,
    aliased output.
    """
    n = x.size
    if n % _LANES == 0:
        # Free metadata reshape of the contiguous array to a lane-dense
        # (rows, 128) slab -> fully packed vregs, unmasked vld/vst.
        x2d = x.reshape(n // _LANES, _LANES)
        y2d = _identity_pallas(x2d)
        return y2d.reshape(x.shape)
    # Fallback: whole array as a single block (block == full array satisfies
    # the (8,128) rule regardless of shape).
    return _identity_pallas(x)


# Donate x at the jit boundary so the pallas-level alias becomes a true
# in-place identity (no output HBM allocation). This invalidates x for the
# caller after the call.
submodel_forward_jit = jax.jit(submodel_forward, donate_argnums=0)


def init_params():
    """Deterministic init of SubModel's parameters (unused in forward)."""
    key = jax.random.PRNGKey(42)
    k1, k2 = jax.random.split(key)
    # conv1: Conv2d(in=2, out=2, kernel_size=1, groups=2)
    #   weight shape: (out_ch, in_ch/groups, kH, kW) = (2, 1, 1, 1); bias: (2,)
    conv1_w = jax.random.normal(k1, (2, 1, 1, 1), jnp.float32) * 0.1
    conv1_b = jax.random.normal(k2, (2,), jnp.float32) * 0.1
    # gn: GroupNorm(num_groups=2, num_channels=2) -> weight ones, bias zeros
    gn_w = jnp.ones((2,), jnp.float32)
    gn_b = jnp.zeros((2,), jnp.float32)
    # param1: torch.ones(1)
    param1 = jnp.ones((1,), jnp.float32)
    return {
        "conv1_w": conv1_w,
        "conv1_b": conv1_b,
        "gn_w": gn_w,
        "gn_b": gn_b,
        "param1": param1,
    }


if __name__ == "__main__":
    # Module state exists (mirroring SubModel.__init__) but is unused by
    # forward(), so it is deliberately NOT passed through the jitted call.
    params = init_params()
    del params

    # Input consistent with the module: NCHW with C=2 (conv1 expects 2 channels).
    key = jax.random.PRNGKey(0)
    shape, dtype = (2, 2, 16, 16), jnp.float32
    x = jax.random.normal(key, shape, dtype)

    y = submodel_forward_jit(x)
    y = jax.block_until_ready(y)

    # x was donated (buffer aliased into y); regenerate it deterministically
    # for the exact bit-identity check (kernel is a bit-exact copy).
    x_expect = jax.random.normal(key, shape, dtype)
    assert y.shape == x_expect.shape and y.dtype == x_expect.dtype
    assert bool(jnp.all(y == x_expect))

    print("KERNEL_OK")
</pallas_src>

<mosaic_0001>
module attributes {stable_mosaic.version = 11 : i64} {
  func.func @_identity_kernel(%arg0: memref<8x128xf32, #tpu.memory_space<vmem>>, %arg1: memref<8x128xf32, #tpu.memory_space<vmem>>) attributes {dimension_semantics = [], scalar_prefetch = 0 : i64, scratch_operands = 0 : i64, tpu.core_type = #tpu.core_type<tc>} {
    %c0 = arith.constant 0 : index
    %c0_0 = arith.constant 0 : index
    %0 = vector.load %arg0[%c0, %c0_0] : memref<8x128xf32, #tpu.memory_space<vmem>>, vector<8x128xf32>
    %c0_1 = arith.constant 0 : index
    %c0_2 = arith.constant 0 : index
    %1 = vector.load %arg1[%c0_1, %c0_2] : memref<8x128xf32, #tpu.memory_space<vmem>>, vector<8x128xf32>
    tpu.vector_store %arg1[%c0_1, %c0_2], %0 {strides = array<i32>} : memref<8x128xf32, #tpu.memory_space<vmem>>, vector<8x128xf32>,
    return
  }
}

</mosaic_0001>

<llo_original>
// kernel: submodel_forward.1
$region0: #{submodel_forward.1}
  #allocation0 [shape = 'u32[]', space=smem, size = 0x4, offset = 0x4, fixed_abs, tag = 'smem constant byte address 0x4 - core index']
  #allocation1 [shape = 'u32[144,128]{1,0:T(1,128)}', space=vmem, size = 0x12000, scoped, tag = 'internal scratch']
  %s0 = inlined_call_operand.vmem [shape: f32[8,128], index: 0, kind: input, shape index: {}, may-alias: {0,1}]
  %s1 = inlined_call_operand.vmem [shape: f32[8,128], index: 1, kind: output, shape index: {}, may-alias: {0,1}]
  %s2 = sld [smem:[#allocation0]]
  $region14: #{submodel_forward.1} parent=0
    _
  %s4 = ssub.s32 1, %s2
  %s5 = scalar_select 0, %s4, %s2
  // Predicated region
  $region2: #{submodel_forward.1} parent=0 // pred_check
    _
  $region3: #{submodel_forward.1} parent=0 // pred_check_branch
    %7 = sbr.rel (0) target = $region5
  $region4: #{submodel_forward.1} parent=0 // pred_region
    _
  $region5: #{submodel_forward.1} parent=0 // pred_fallthru
    _
  %v8 = vld [vmem:[%s0] sm:$0xff]
  %9 = vst [vmem:[%s1] sm:$0xff] %v8
  // Predicated region
  $region6: #{submodel_forward.1} parent=0 // pred_check
    _
  $region7: #{submodel_forward.1} parent=0 // pred_check_branch
    %11 = sbr.rel (0) target = $region9
  $region8: #{submodel_forward.1} parent=0 // pred_region
    _
  $region9: #{submodel_forward.1} parent=0 // pred_fallthru
    _
  // Predicated region
  $region10: #{submodel_forward.1} parent=0 // pred_check
    _
  $region11: #{submodel_forward.1} parent=0 // pred_check_branch
    %13 = sbr.rel (0) target = $region13
  $region12: #{submodel_forward.1} parent=0 // pred_region
    _
  $region13: #{submodel_forward.1} parent=0 // pred_fallthru
    _

</llo_original>
